<compile_context>
chip_gen: v7x
topology: tpu7x:2x2x1
jax: 0.10.0
libtpu: 0.0.40
codegen_flags: <defaults>
</compile_context>

<pallas_src>
import jax
import jax.numpy as jnp
import numpy as np
from jax.experimental import pallas as pl
from jax.experimental.pallas import tpu as pltpu


# ------------------------- fused single-pass kernel -------------------------
def eca_fused_kernel(x_ref, w_ref, o_ref):
    # x_ref: (TN, C*L) input dtype; w_ref: (1, C*L) float32 (center tap / L).
    x = x_ref[...]
    w = w_ref[...]
    # Weighted row-sum == center-tap conv applied to the per-sample channel means.
    s = jnp.sum(x.astype(jnp.float32) * w, axis=-1, keepdims=True)     # (TN, 1) f32
    gate = jax.nn.sigmoid(s).astype(o_ref.dtype)                       # (TN, 1)
    o_ref[...] = x * gate


# ----------------------- two-pass (reduce, then scale) ----------------------
def eca_reduce_kernel(x_ref, w_ref, s_ref):
    # Accumulate the weighted row-sum across C*L tiles (last grid axis).
    @pl.when(pl.program_id(1) == 0)
    def _():
        s_ref[...] = jnp.zeros_like(s_ref)
    s_ref[...] += jnp.sum(x_ref[...].astype(jnp.float32) * w_ref[...],
                          axis=-1, keepdims=True)


def eca_scale_kernel(x_ref, s_ref, o_ref):
    # Sigmoid fused here (EUP slot is idle) -> no separate inter-pass XLA op.
    gate = jax.nn.sigmoid(s_ref[...]).astype(o_ref.dtype)              # (TN, 1)
    o_ref[...] = x_ref[...] * gate


def _chip_vmem_limits():
    try:
        cap = int(pltpu.get_tpu_info().vmem_capacity_bytes)
    except Exception:  # pragma: no cover - conservative default (fits all gens)
        cap = 64 * 1024 * 1024
    # ~100 MiB scoped limit on v5e/v6e (128 MiB physical), ~50 MiB on v7x (64 MiB).
    vmem_limit = min(int(cap * 0.78), 100 * 1024 * 1024)
    return cap, vmem_limit


def eca_forward(x, conv_weight, *, vmem_budget_bytes=None, force_two_pass=False):
    """x: (N, C, L); conv_weight: (1, C, K) as in PyTorch Conv1d(C, 1, K)."""
    N, C, L = x.shape
    K = conv_weight.shape[-1]
    # ECA always uses an odd kernel size; the center-tap folding relies on it.
    assert K % 2 == 1, "ECA conv kernel_size must be odd"
    center = (K - 1) // 2
    CL = C * L
    itemsize = jnp.dtype(x.dtype).itemsize

    _, vmem_limit = _chip_vmem_limits()
    if vmem_budget_bytes is None:
        vmem_budget_bytes = int(vmem_limit * 0.85)   # 15% headroom under the limit
    cparams = dict(vmem_limit_bytes=vmem_limit)

    # Fold AdaptiveAvgPool1d's 1/L and the zero-padded length-1 conv (only the
    # center tap contributes) into a single flat float32 weight aligned with the
    # lane-dense (c*L + l) flattening of x.  Kept in f32 so the gate sum matches
    # the fp32 reference even for bf16 inputs (VALU slack makes this free).
    w_center = conv_weight[0, :, center]                               # (C,)
    wflat = (jnp.repeat(w_center, L).astype(jnp.float32)
             * jnp.float32(1.0 / L)).reshape(1, CL)
    x2 = x.reshape(N, CL)                                              # lane-dense

    # ---- fused path: whole (TN, C*L) rows per grid step, 2x HBM traffic ----
    tn = None
    if not force_two_pass:
        def fused_bytes(r):
            # x + out blocks (double-buffered, input dtype) + f32 weight block
            # (double-buffered) + f32 x*w product temporaries.
            return 4 * r * CL * itemsize + 2 * CL * 4 + 2 * r * CL * 4

        cands = sorted({d for d in range(1, min(N, 2048) + 1) if N % d == 0},
                       reverse=True)
        if N >= 16:
            # Keep >= 2 "parallel" grid steps so v7x's two TensorCores both work.
            cands = [c for c in cands if 2 * c <= N]
        min_tn = 8 if N >= 8 else 1   # fill sublanes; tiny batches taken as-is
        for cand in cands:
            if cand >= min_tn and fused_bytes(cand) <= vmem_budget_bytes:
                tn = cand
                break

    if tn is not None:
        out2 = pl.pallas_call(
            eca_fused_kernel,
            out_shape=jax.ShapeDtypeStruct((N, CL), x.dtype),
            grid=(N // tn,),
            in_specs=[
                pl.BlockSpec((tn, CL), lambda i: (i, 0)),
                pl.BlockSpec((1, CL), lambda i: (0, 0)),
            ],
            out_specs=pl.BlockSpec((tn, CL), lambda i: (i, 0)),
            compiler_params=pltpu.CompilerParams(
                dimension_semantics=("parallel",), **cparams),
        )(x2, wflat)
        return out2.reshape(N, C, L)

    # ---- two-pass path: tile C*L so blocks fit VMEM (3x HBM traffic) ----
    # Pad the flattened axis to a multiple of 128 (zeros contribute nothing to
    # the weighted sum); keeps stores lane-dense / unmasked as well.
    CLp = -(-CL // 128) * 128
    if CLp != CL:
        x2 = jnp.pad(x2, ((0, 0), (0, CLp - CL)))
        wflat = jnp.pad(wflat, ((0, 0), (0, CLp - CL)))

    def blk_bytes(r, c):
        # Conservative per-step footprint covering both passes.
        return 4 * r * c * itemsize + 2 * c * 4 + 2 * r * c * 4

    # Row group: largest divisor of N up to 256 (weight re-DMA overhead <2%),
    # with >= 2 grid steps when N >= 16 (v7x megacore).
    row_divs = [d for d in range(1, min(N, 256) + 1) if N % d == 0]
    if N >= 16:
        capped = [d for d in row_divs if 2 * d <= N]
        if capped:
            row_divs = capped
    tn2 = max(row_divs)
    while tn2 > 1 and blk_bytes(tn2, 128) > vmem_budget_bytes:
        smaller = [d for d in row_divs if d < tn2]
        tn2 = max(smaller) if smaller else 1

    tcl = 128
    for c in range(CLp, 127, -128):
        if CLp % c == 0 and blk_bytes(tn2, c) <= vmem_budget_bytes:
            tcl = c
            break

    grid = (N // tn2, CLp // tcl)

    # Pass 1: per-sample weighted sums (f32 accumulator resident across j).
    s = pl.pallas_call(
        eca_reduce_kernel,
        out_shape=jax.ShapeDtypeStruct((N, 1), jnp.float32),
        grid=grid,
        in_specs=[
            pl.BlockSpec((tn2, tcl), lambda i, j: (i, j)),
            pl.BlockSpec((1, tcl), lambda i, j: (0, j)),
        ],
        out_specs=pl.BlockSpec((tn2, 1), lambda i, j: (i, 0)),
        compiler_params=pltpu.CompilerParams(
            dimension_semantics=("parallel", "arbitrary"), **cparams),
    )(x2, wflat)

    # Pass 2: stream x once more, apply sigmoid(raw_sum) gate in-kernel.
    out2 = pl.pallas_call(
        eca_scale_kernel,
        out_shape=jax.ShapeDtypeStruct((N, CLp), x.dtype),
        grid=grid,
        in_specs=[
            pl.BlockSpec((tn2, tcl), lambda i, j: (i, j)),
            pl.BlockSpec((tn2, 1), lambda i, j: (i, 0)),
        ],
        out_specs=pl.BlockSpec((tn2, tcl), lambda i, j: (i, j)),
        compiler_params=pltpu.CompilerParams(
            dimension_semantics=("parallel", "parallel"), **cparams),
    )(x2, s)
    return out2[:, :CL].reshape(N, C, L)


def eca_reference(x, conv_weight):
    """Plain-JAX reference matching the PyTorch forward exactly."""
    ybar = jnp.mean(x, axis=-1, keepdims=True)                         # (N, C, 1)
    K = conv_weight.shape[-1]
    pad = (K - 1) // 2
    ypad = jnp.pad(ybar, ((0, 0), (0, 0), (pad, pad)))                 # (N, C, 1+2p)
    y = jnp.einsum("nck,ock->no", ypad, conv_weight)[:, :, None]       # (N, 1, 1)
    return x * jax.nn.sigmoid(y)


if __name__ == "__main__":
    key = jax.random.PRNGKey(0)
    kx, kw, kx2 = jax.random.split(key, 3)

    N, C, L, K = 2, 8, 16, 3            # hidden_dim = 8, kernel_size = 3
    x = jax.random.normal(kx, (N, C, L), dtype=jnp.float32)

    # Conv1d weight, PyTorch shape (out_ch=1, in_ch=C, K), kaiming-uniform-like bound.
    fan_in = C * K
    bound = 1.0 / np.sqrt(fan_in)
    conv_weight = jax.random.uniform(kw, (1, C, K), dtype=jnp.float32,
                                     minval=-bound, maxval=bound)

    # Fused single-pass path (chip-derived VMEM budget).
    out = jax.block_until_ready(eca_forward(x, conv_weight))
    np.testing.assert_allclose(np.asarray(out),
                               np.asarray(eca_reference(x, conv_weight)),
                               rtol=1e-5, atol=1e-5)

    # Two-pass fallback (forced, tiny budget) with a non-128-multiple flattened
    # axis (C*L = 160 -> padded to 256, tiled into two 128-lane chunks) to make
    # sure the large-shape / v7x fallback and the padding path also match.
    L2 = 20
    xb = jax.random.normal(kx2, (N, C, L2), dtype=jnp.float32)
    out2 = jax.block_until_ready(
        eca_forward(xb, conv_weight, force_two_pass=True,
                    vmem_budget_bytes=8 * 1024))
    np.testing.assert_allclose(np.asarray(out2),
                               np.asarray(eca_reference(xb, conv_weight)),
                               rtol=1e-5, atol=1e-5)

    print("KERNEL_OK")
</pallas_src>

<mosaic_0001>
module attributes {stable_mosaic.version = 11 : i64} {
  func.func @eca_fused_kernel(%arg0: i32, %arg1: memref<2x128xf32, #tpu.memory_space<vmem>>, %arg2: memref<1x128xf32, #tpu.memory_space<vmem>>, %arg3: memref<2x128xf32, #tpu.memory_space<vmem>>) attributes {dimension_semantics = [#tpu.dimension_semantics<parallel>], iteration_bounds = array<i64: 1>, scalar_prefetch = 0 : i64, scratch_operands = 0 : i64, tpu.core_type = #tpu.core_type<tc>, window_params = [{transform_indices = @transform_0, window_bounds = array<i64: 2, 128>}, {pipeline_mode = #tpu.pipeline_mode<synchronous>, transform_indices = @transform_1, window_bounds = array<i64: 1, 128>}, {transform_indices = @transform_2, window_bounds = array<i64: 2, 128>}]} {
    %c0 = arith.constant 0 : index
    %c0_0 = arith.constant 0 : index
    %0 = vector.load %arg1[%c0, %c0_0] : memref<2x128xf32, #tpu.memory_space<vmem>>, vector<2x128xf32>
    %c0_1 = arith.constant 0 : index
    %c0_2 = arith.constant 0 : index
    %1 = vector.load %arg2[%c0_1, %c0_2] : memref<1x128xf32, #tpu.memory_space<vmem>>, vector<1x128xf32>
    %2 = vector.broadcast %1 : vector<1x128xf32> to vector<2x128xf32>
    %3 = arith.mulf %0, %2 : vector<2x128xf32>
    %cst = arith.constant dense<0.000000e+00> : vector<2xf32>
    %4 = vector.multi_reduction <add>, %3, %cst [1] : vector<2x128xf32> to vector<2xf32>
    %5 = vector.shape_cast %4 : vector<2xf32> to vector<2x1xf32>
    %6 = arith.negf %5 : vector<2x1xf32>
    %7 = math.exp %6 : vector<2x1xf32>
    %cst_3 = arith.constant 1.000000e+00 : f32
    %8 = vector.broadcast %cst_3 : f32 to vector<2x1xf32>
    %9 = arith.addf %8, %7 : vector<2x1xf32>
    %10 = arith.divf %8, %9 : vector<2x1xf32>
    %11 = vector.broadcast %10 : vector<2x1xf32> to vector<2x128xf32>
    %12 = arith.mulf %0, %11 : vector<2x128xf32>
    %c0_4 = arith.constant 0 : index
    %c0_5 = arith.constant 0 : index
    %13 = vector.load %arg3[%c0_4, %c0_5] : memref<2x128xf32, #tpu.memory_space<vmem>>, vector<2x128xf32>
    tpu.vector_store %arg3[%c0_4, %c0_5], %12 {strides = array<i32>} : memref<2x128xf32, #tpu.memory_space<vmem>>, vector<2x128xf32>,
    return
  }
  func.func @transform_0(%arg0: i32) -> (i32, i32) {
    %c0_i32 = arith.constant 0 : i32
    %c0_i32_0 = arith.constant 0 : i32
    return %arg0, %c0_i32 : i32, i32
  }
  func.func @transform_1(%arg0: i32) -> (i32, i32) {
    %c0_i32 = arith.constant 0 : i32
    %c0_i32_0 = arith.constant 0 : i32
    %c0_i32_1 = arith.constant 0 : i32
    return %c0_i32, %c0_i32_0 : i32, i32
  }
  func.func @transform_2(%arg0: i32) -> (i32, i32) {
    %c0_i32 = arith.constant 0 : i32
    %c0_i32_0 = arith.constant 0 : i32
    return %arg0, %c0_i32 : i32, i32
  }
}

</mosaic_0001>

<llo_original>
// kernel: tpu_custom_call.1
$region0: #{tpu_custom_call.1}
  #allocation0 [shape = 'u32[]', space=smem, size = 0x4, offset = 0x4, fixed_abs, tag = 'smem constant byte address 0x4 - core index']
  #allocation1 [shape = 'u32[144,128]{1,0:T(1,128)}', space=vmem, size = 0x12000, scoped, tag = 'internal scratch']
  %s0 = inlined_call_operand.hbm [shape: f32[2,128], index: 0, kind: input, shape index: {}]
  %s1 = inlined_call_operand.vmem [shape: f32[1,128], index: 1, kind: input, shape index: {}]
  %s2 = inlined_call_operand.hbm [shape: f32[2,128], index: 2, kind: output, shape index: {}]
  %s3 = sld [smem:[#allocation0]]
  $region22: #{tpu_custom_call.1} parent=0
    _
  %s5 = ssub.s32 1, %s3
  %s6 = scalar_select 0, %s5, %s3
  $region1: #{tpu_custom_call.1} parent=0
    #allocation2 [shape = 'u8[1024]{0}', space=vmem, size = 0x400, scoped, tag = 'input window, operand 0, single buffered']
    #allocation3 [shape = 's32[1]{0}', space=sflag, size = 0x4, scoped, tag = 'scoped memory for tpu_custom_call.1']
    #allocation4 [shape = 's32[1]{0}', space=sflag, size = 0x4, scoped, tag = 'scoped memory for tpu_custom_call.1']
    #allocation5 [shape = 'u8[1024]{0}', space=vmem, size = 0x400, scoped, tag = 'output window, operand 0, single buffered']
    %7 = vsyncpa [#allocation3], 0
    %8 = vsyncpa [#allocation4], 0
    // Predicated region
    $region2: #{tpu_custom_call.1} parent=1 // pred_check
      _
    $region3: #{tpu_custom_call.1} parent=1 // pred_check_branch
      %10 = sbr.rel (0) target = $region5
    $region4: #{tpu_custom_call.1} parent=1 // pred_region
      %s12 = ssub.s32 32, 32
      %13 = vsyncadd [#allocation3], %s12
      %s15 = sshll.u32 [#allocation2], 4
      %s16 = int_to_ptr.vmem [resolvable:$true] %s15
      %18 = dma.hbm_to_vmem [thread:$0]  %s0, 32, %s16, [#allocation3]
    $region5: #{tpu_custom_call.1} parent=1 // pred_fallthru
      _
    // Predicated region
    $region6: #{tpu_custom_call.1} parent=1 // pred_check
      _
    $region7: #{tpu_custom_call.1} parent=1 // pred_check_branch
      %20 = sbr.rel (0) target = $region9
    $region8: #{tpu_custom_call.1} parent=1 // pred_region
      _
    $region9: #{tpu_custom_call.1} parent=1 // pred_fallthru
      _
    // Predicated region
    $region10: #{tpu_custom_call.1} parent=1 // pred_check
      _
    $region11: #{tpu_custom_call.1} parent=1 // pred_check_branch
      %22 = sbr.rel (0) target = $region13
    $region12: #{tpu_custom_call.1} parent=1 // pred_region
      %23 = dma.done [#allocation3], 32
    $region13: #{tpu_custom_call.1} parent=1 // pred_fallthru
      _
    %v24 = vld [vmem:[#allocation2] sm:$0x3]
    %v25 = vld [vmem:[%s1] sm:$0x1]
    %v27 = vlaneseq
    %v28 = vshrl.u32 %v27, 7
    %v29 = vsub.s32 0, %v28
    %v30 = vrot.slane %v25, %v29
    %v32 = vmul.f32 %v24, %v30
    %vm33 = vcmask 1041408
    %v34 = vsel %vm33, %v32, 0.0
    %35 = vadd.xlane.f32.xlu0 %v34
    %v36 = vpop.xlane.xlu0 %35
    %v37 = vxor.u32 %v36, 2147483648
    %v38 = vmul.f32 %v37, 1.442695
    %v39 = vpow.pop %v38
    %v40 = vadd.f32 %v39, 1.0
    %v41 = vrcp.pop %v40
    %v42 = vmul.f32 1.0, %v41
    %v43 = vmul.f32 %v24, %v42
    %44 = vst [vmem:[#allocation5] sm:$0x3] %v43
    // Predicated region
    $region14: #{tpu_custom_call.1} parent=1 // pred_check
      _
    $region15: #{tpu_custom_call.1} parent=1 // pred_check_branch
      %46 = sbr.rel (0) target = $region17
    $region16: #{tpu_custom_call.1} parent=1 // pred_region
      %s48 = ssub.s32 32, 32
      %49 = vsyncadd [#allocation4], %s48
      %s51 = sshll.u32 [#allocation5], 4
      %s52 = int_to_ptr.vmem [resolvable:$true] %s51
      %54 = dma.vmem_to_hbm [thread:$0]  %s52, 32, %s2, [#allocation4]
    $region17: #{tpu_custom_call.1} parent=1 // pred_fallthru
      _
    // Predicated region
    $region18: #{tpu_custom_call.1} parent=1 // pred_check
      _
    $region19: #{tpu_custom_call.1} parent=1 // pred_check_branch
      %56 = sbr.rel (0) target = $region21
    $region20: #{tpu_custom_call.1} parent=1 // pred_region
      %57 = dma.done [#allocation4], 32
    $region21: #{tpu_custom_call.1} parent=1 // pred_fallthru
      _
    %58 = vsyncpa [#allocation3], 1
    %59 = vsyncpa [#allocation4], 1

</llo_original>
